<compile_context>
chip_gen: v6e
topology: v6e:2x2x1
jax: 0.10.0
libtpu: 0.0.40
codegen_flags: <defaults>
</compile_context>

<pallas_src>
import numpy as np
import jax
import jax.numpy as jnp
from jax.experimental import pallas as pl
from jax.experimental.pallas import tpu as pltpu


def _round_up(x, m):
    return ((x + m - 1) // m) * m


# ---- db2 ('D4') analysis low-pass filter, computed exactly (== pywt dec_lo) ----
def _db2_dec_lo():
    s3 = np.sqrt(3.0)
    d = 4.0 * np.sqrt(2.0)
    return np.array([(1 - s3) / d, (3 - s3) / d, (3 + s3) / d, (1 + s3) / d],
                    dtype=np.float64)


def _analysis_matrix(n, dec_lo):
    """Dense matrix M of shape (out_len, n) such that M @ x equals the low-pass
    half of a 1D DWT with zero padding, matching pytorch_wavelets
    lowlevel.afb1d(mode='zero') (conv2d with reversed dec_lo, stride 2)."""
    L = len(dec_lo)
    h_rev = dec_lo[::-1]                 # prep_filt_afb1d reverses dec_lo for conv2d
    outsize = (n + L - 1) // 2           # pywt.dwt_coeff_len(n, L, 'zero')
    p = 2 * (outsize - 1) - n + L
    pad = p // 2
    M = np.zeros((outsize, n), dtype=np.float64)
    for i in range(outsize):
        for k in range(L):
            j = 2 * i + k - pad
            if 0 <= j < n:               # indices outside [0, n) are zero padding
                M[i, j] += h_rev[k]
    return M


# ----------------------------- Pallas kernel ---------------------------------
def _dwt_ll_kernel(bt_ref, ablk_ref, x_ref, o_ref, t_ref):
    # Pass 1 (width filter): all rows of the G-image block in one MXU matmul.
    #   (G*Hp, W) @ (W, Woutp) -> (G*Hp, Woutp)
    t_ref[...] = jnp.dot(x_ref[...], bt_ref[...],
                         preferred_element_type=jnp.float32)
    # Pass 2 (height filter): block-diagonal diag(A_h,...,A_h) applies the
    # height filter to every image independently in a single MXU matmul --
    # no in-kernel transposes, output already in (Hout, Wout) orientation.
    #   (G*Houtp, G*Hp) @ (G*Hp, Woutp) -> (G*Houtp, Woutp)
    o_ref[...] = jnp.dot(ablk_ref[...], t_ref[...],
                         preferred_element_type=jnp.float32).astype(o_ref.dtype)


def _pick_group(nc, h_pad, w, hout_pad, wout_pad):
    """Images per grid step: big enough to amortize step overhead, small enough
    for VMEM (blocks + G^2-sized block-diagonal constant), and leaving >= 2 grid
    steps so a 2-TensorCore chip can shard the image axis."""
    budget = 4 << 20
    per_img = (h_pad * w + h_pad * wout_pad + hout_pad * wout_pad) * 4
    g = max(1, min(nc, 32, budget // max(per_img, 1)))
    while g > 1 and (g * hout_pad) * (g * h_pad) * 4 > budget:
        g -= 1
    if nc >= 2 and nc < 2 * g:
        g = (nc + 1) // 2
    return g


# ------------------------------- wrapper --------------------------------------
@jax.jit
def wavelet_forward(img):
    """JAX/Pallas equivalent of Wavelet.forward: yl band of db2 DWT (zero pad, J=1)."""
    img = jnp.asarray(img, jnp.float32)
    while img.ndim < 4:                  # mirrors torch unsqueeze(0) loop
        img = img[None]
    N, C, H, W = img.shape
    NC = N * C

    # host-side constant setup (runs once per (H, W) thanks to jax.jit caching)
    dec_lo = _db2_dec_lo()
    A_h = _analysis_matrix(H, dec_lo)                      # (Hout, H)
    A_w = A_h if W == H else _analysis_matrix(W, dec_lo)   # (Wout, W)
    Hout, Wout = A_h.shape[0], A_w.shape[0]

    H_pad = _round_up(H, 8)
    Hout_pad = _round_up(Hout, 8)
    Wout_pad = _round_up(Wout, 8)

    G = _pick_group(NC, H_pad, W, Hout_pad, Wout_pad)
    NC_pad = _round_up(NC, G)
    n_steps = NC_pad // G

    # pre-transposed / pre-padded constants (width filter) ...
    bt_np = np.zeros((W, Wout_pad), np.float32)
    bt_np[:, :Wout] = A_w.T
    # ... and block-diagonal height filter diag(A_h_pad, ..., A_h_pad)
    a_pad = np.zeros((Hout_pad, H_pad), np.float32)
    a_pad[:Hout, :H] = A_h
    ablk_np = np.kron(np.eye(G, dtype=np.float32), a_pad)  # (G*Houtp, G*Hp)

    x = img.reshape(NC, H, W)
    if NC_pad != NC or H_pad != H:
        x = jnp.pad(x, ((0, NC_pad - NC), (0, H_pad - H), (0, 0)))
    x2 = x.reshape(NC_pad * H_pad, W)                       # stacked rows, lane dim = W

    bt_spec = pl.BlockSpec((W, Wout_pad), lambda i: (0, 0))
    ablk_spec = pl.BlockSpec((G * Hout_pad, G * H_pad), lambda i: (0, 0))
    x_spec = pl.BlockSpec((G * H_pad, W), lambda i: (i, 0))
    o_spec = pl.BlockSpec((G * Hout_pad, Wout_pad), lambda i: (i, 0))

    cost = pl.CostEstimate(
        flops=(2 * NC_pad * H_pad * W * Wout_pad
               + 2 * n_steps * (G * Hout_pad) * (G * H_pad) * Wout_pad),
        transcendentals=0,
        bytes_accessed=4 * (NC_pad * H_pad * W + NC_pad * Hout_pad * Wout_pad
                            + W * Wout_pad + (G * Hout_pad) * (G * H_pad)),
    )

    out = pl.pallas_call(
        _dwt_ll_kernel,
        out_shape=jax.ShapeDtypeStruct((NC_pad * Hout_pad, Wout_pad), jnp.float32),
        grid=(n_steps,),
        in_specs=[bt_spec, ablk_spec, x_spec],
        out_specs=o_spec,
        scratch_shapes=[pltpu.VMEM((G * H_pad, Wout_pad), jnp.float32)],
        compiler_params=pltpu.CompilerParams(
            dimension_semantics=("parallel",)),
        cost_estimate=cost,
    )(jnp.asarray(bt_np), jnp.asarray(ablk_np), x2)

    # crop padding + restore (N, C, Hout, Wout); no transpose needed.
    yl = out.reshape(NC_pad, Hout_pad, Wout_pad)[:NC, :Hout, :Wout]
    yl = yl.reshape(N, C, Hout, Wout)
    # mimic torch .squeeze(0): only drops the batch dim if it equals 1
    if yl.shape[0] == 1:
        yl = yl[0]
    return yl


if __name__ == "__main__":
    key = jax.random.PRNGKey(0)
    x = jax.random.normal(key, (2, 4, 16, 16), dtype=jnp.float32)

    out = jax.block_until_ready(wavelet_forward(x))

    # pure-JAX reference of the same math (A @ X @ A^T per channel)
    dec_lo = _db2_dec_lo()
    A = jnp.asarray(_analysis_matrix(16, dec_lo), jnp.float32)
    ref = jnp.einsum("ph,nchw,qw->ncpq", A, x, A)

    assert out.shape == (2, 4, 9, 9), out.shape
    np.testing.assert_allclose(np.asarray(out), np.asarray(ref), rtol=1e-5, atol=1e-5)
    print("KERNEL_OK")
</pallas_src>

<mosaic_0001>
module attributes {stable_mosaic.version = 11 : i64} {
  func.func @_dwt_ll_kernel(%arg0: i32, %arg1: memref<16x16xf32, #tpu.memory_space<vmem>>, %arg2: memref<64x64xf32, #tpu.memory_space<vmem>>, %arg3: memref<64x16xf32, #tpu.memory_space<vmem>>, %arg4: memref<64x16xf32, #tpu.memory_space<vmem>>, %arg5: memref<64x16xf32, #tpu.memory_space<vmem>>) attributes {dimension_semantics = [#tpu.dimension_semantics<parallel>], iteration_bounds = array<i64: 2>, scalar_prefetch = 0 : i64, scratch_operands = 1 : i64, tpu.core_type = #tpu.core_type<tc>, window_params = [{pipeline_mode = #tpu.pipeline_mode<synchronous>, transform_indices = @transform_0, window_bounds = array<i64: 16, 16>}, {pipeline_mode = #tpu.pipeline_mode<synchronous>, transform_indices = @transform_1, window_bounds = array<i64: 64, 64>}, {transform_indices = @transform_2, window_bounds = array<i64: 64, 16>}, {transform_indices = @transform_3, window_bounds = array<i64: 64, 16>}]} {
    %c0 = arith.constant 0 : index
    %c0_0 = arith.constant 0 : index
    %0 = vector.load %arg3[%c0, %c0_0] : memref<64x16xf32, #tpu.memory_space<vmem>>, vector<64x16xf32>
    %c0_1 = arith.constant 0 : index
    %c0_2 = arith.constant 0 : index
    %1 = vector.load %arg1[%c0_1, %c0_2] : memref<16x16xf32, #tpu.memory_space<vmem>>, vector<16x16xf32>
    %cst = arith.constant dense<0.000000e+00> : vector<64x16xf32>
    %2 = tpu.matmul %0, %1, %cst {dimension_numbers = #tpu.dot_dimension_numbers<[1], [0], [0], [1], [0, 0, 1, 1], [], []>} : vector<64x16xf32>, vector<16x16xf32>, vector<64x16xf32> -> vector<64x16xf32>
    %c0_3 = arith.constant 0 : index
    %c0_4 = arith.constant 0 : index
    %3 = vector.load %arg5[%c0_3, %c0_4] : memref<64x16xf32, #tpu.memory_space<vmem>>, vector<64x16xf32>
    tpu.vector_store %arg5[%c0_3, %c0_4], %2 {strides = array<i32>} : memref<64x16xf32, #tpu.memory_space<vmem>>, vector<64x16xf32>,
    %c0_5 = arith.constant 0 : index
    %c0_6 = arith.constant 0 : index
    %4 = vector.load %arg2[%c0_5, %c0_6] : memref<64x64xf32, #tpu.memory_space<vmem>>, vector<64x64xf32>
    %c0_7 = arith.constant 0 : index
    %c0_8 = arith.constant 0 : index
    %5 = vector.load %arg5[%c0_7, %c0_8] : memref<64x16xf32, #tpu.memory_space<vmem>>, vector<64x16xf32>
    %cst_9 = arith.constant dense<0.000000e+00> : vector<64x16xf32>
    %6 = tpu.matmul %4, %5, %cst_9 {dimension_numbers = #tpu.dot_dimension_numbers<[1], [0], [0], [1], [0, 0, 1, 1], [], []>} : vector<64x64xf32>, vector<64x16xf32>, vector<64x16xf32> -> vector<64x16xf32>
    %c0_10 = arith.constant 0 : index
    %c0_11 = arith.constant 0 : index
    %7 = vector.load %arg4[%c0_10, %c0_11] : memref<64x16xf32, #tpu.memory_space<vmem>>, vector<64x16xf32>
    tpu.vector_store %arg4[%c0_10, %c0_11], %6 {strides = array<i32>} : memref<64x16xf32, #tpu.memory_space<vmem>>, vector<64x16xf32>,
    return
  }
  func.func @transform_0(%arg0: i32) -> (i32, i32) {
    %c0_i32 = arith.constant 0 : i32
    %c0_i32_0 = arith.constant 0 : i32
    %c0_i32_1 = arith.constant 0 : i32
    return %c0_i32, %c0_i32_0 : i32, i32
  }
  func.func @transform_1(%arg0: i32) -> (i32, i32) {
    %c0_i32 = arith.constant 0 : i32
    %c0_i32_0 = arith.constant 0 : i32
    %c0_i32_1 = arith.constant 0 : i32
    return %c0_i32, %c0_i32_0 : i32, i32
  }
  func.func @transform_2(%arg0: i32) -> (i32, i32) {
    %c0_i32 = arith.constant 0 : i32
    %c0_i32_0 = arith.constant 0 : i32
    return %arg0, %c0_i32 : i32, i32
  }
  func.func @transform_3(%arg0: i32) -> (i32, i32) {
    %c0_i32 = arith.constant 0 : i32
    %c0_i32_0 = arith.constant 0 : i32
    return %arg0, %c0_i32 : i32, i32
  }
}

</mosaic_0001>

<llo_original>
// kernel: wavelet_forward.1
$region0: #{wavelet_forward.1}
  #allocation0 [shape = 'u32[]', space=smem, size = 0x4, offset = 0x4, fixed_abs, tag = 'smem constant byte address 0x4 - core index']
  #allocation1 [shape = 'u32[144,128]{1,0:T(1,128)}', space=vmem, size = 0x12000, scoped, tag = 'internal scratch']
  #allocation2 [shape = 'f32[64,16]{1,0:T(8,128)}', space=vmem, size = 0x8000, scoped, tag = 'scratch operand']
  %s0 = inlined_call_operand.hbm [shape: f32[16,16], index: 0, kind: input, shape index: {}]
  %s1 = inlined_call_operand.hbm [shape: f32[64,64], index: 1, kind: input, shape index: {}]
  %s2 = inlined_call_operand.hbm [shape: f32[128,16], index: 2, kind: input, shape index: {}]
  %s3 = inlined_call_operand.vmem [shape: f32[128,16], index: 3, kind: output, shape index: {}]
  %s4 = sld [smem:[#allocation0]]
  $region57: #{wavelet_forward.1} parent=0
    _
  %s6 = ssub.s32 1, %s4
  %s7 = scalar_select 0, %s6, %s4
  $region1: #{wavelet_forward.1} parent=0
    #allocation3 [shape = 'u8[8192]{0}', space=vmem, size = 0x2000, scoped, tag = 'input window, operand 0, single buffered']
    #allocation4 [shape = 's32[2]{0}', space=sflag, size = 0x8, scoped, tag = 'scoped memory for wavelet_forward.1']
    #allocation5 [shape = 'u8[32768]{0}', space=vmem, size = 0x8000, scoped, tag = 'input window, operand 1, single buffered']
    #allocation6 [shape = 's32[1]{0}', space=sflag, size = 0x4, scoped, tag = 'scoped memory for wavelet_forward.1']
    #allocation7 [shape = 'u8[65536]{0}', space=vmem, size = 0x10000, scoped, tag = 'input window, operand 2']
    %8 = vsyncpa [#allocation4], 0
    %9 = vsyncpa [#allocation6], 0
    loop: start=0, step=1, limit=4
    $region2: #{wavelet_forward.1} parent=1 // loop_pre_header
      _
    $region3: #{wavelet_forward.1} parent=1 // loop_header
      %s11 = sphi 0, %s15
      %p12 = scmp.ge.s32.totalorder %s11, 4
      %s19 = sphi 0, %s19
      %s21 = sphi 0, %s19
      %s22 = sphi 0, %s21
      %s36 = sphi 0, %s22
      %s40 = sphi 0, %s40
      %s42 = sphi 0, %s40
      %s43 = sphi 0, %s42
      %s57 = sphi 0, %s43
      %s63 = sphi 0, %s65
      %s66 = sphi 0, %s63
      %s67 = sphi 0, %s66
      %s83 = sphi 0, %s67
      %s89 = sphi 0, %s91
      %s92 = sphi 0, %s89
      %s93 = sphi 0, %s92
      %s109 = sphi 0, %s93
    $region4: #{wavelet_forward.1} parent=1 // loop_header_branch
      %14 = sbr.rel (%p12) target = $region8
    $region5: #{wavelet_forward.1} parent=1 // loop_body
      %s16 = ssub.s32 %s11, 1
      %s17 = ssub.s32 %s11, 2
      %s18 = sadd.s32 %s11, 1
      %s20 = sadd.s32 %s19, 1
      %p23 = scmp.eq.s32.totalorder %s11, 1
      %p24 = scmp.ne.s32.totalorder %s19, %s21
      %p25 = scmp.eq.s32.totalorder %s11, 0
      %p26 = por %p24, %p25
      %p27 = scmp.ne.s32.totalorder %s19, %s21
      %p28 = scmp.eq.s32.totalorder %s16, 1
      %p29 = por %p27, %p28
      %p30 = scmp.ne.s32.totalorder %s21, %s22
      %p31 = scmp.eq.s32.totalorder %s16, 0
      %p32 = por %p30, %p31
      %p33 = scmp.ne.s32.totalorder %s21, %s22
      %p34 = scmp.eq.s32.totalorder %s17, 1
      %p35 = por %p33, %p34
      %p37 = scmp.ne.s32.totalorder %s22, %s36
      %p38 = scmp.eq.s32.totalorder %s17, 0
      %p39 = por %p37, %p38
      %s41 = sadd.s32 %s40, 1
      %p44 = scmp.eq.s32.totalorder %s11, 1
      %p45 = scmp.ne.s32.totalorder %s40, %s42
      %p46 = scmp.eq.s32.totalorder %s11, 0
      %p47 = por %p45, %p46
      %p48 = scmp.ne.s32.totalorder %s40, %s42
      %p49 = scmp.eq.s32.totalorder %s16, 1
      %p50 = por %p48, %p49
      %p51 = scmp.ne.s32.totalorder %s42, %s43
      %p52 = scmp.eq.s32.totalorder %s16, 0
      %p53 = por %p51, %p52
      %p54 = scmp.ne.s32.totalorder %s42, %s43
      %p55 = scmp.eq.s32.totalorder %s17, 1
      %p56 = por %p54, %p55
      %p58 = scmp.ne.s32.totalorder %s43, %s57
      %p59 = scmp.eq.s32.totalorder %s17, 0
      %p60 = por %p58, %p59
      %s61 = ssub.s32 %s11, %s18
      %p62 = scmp.eq.s32.totalorder %s61, 0
      %s64 = sadd.s32 %s63, 1
      %s65 = scalar_select %p62, %s63, %s64
      %p68 = pneg %p62
      %p69 = scmp.eq.s32.totalorder %s11, 1
      %p70 = por %p68, %p69
      %p71 = scmp.ne.s32.totalorder %s63, %s66
      %p72 = scmp.eq.s32.totalorder %s11, 0
      %p73 = por %p71, %p72
      %p74 = scmp.ne.s32.totalorder %s63, %s66
      %p75 = scmp.eq.s32.totalorder %s16, 1
      %p76 = por %p74, %p75
      %p77 = scmp.ne.s32.totalorder %s66, %s67
      %p78 = scmp.eq.s32.totalorder %s16, 0
      %p79 = por %p77, %p78
      %p80 = scmp.ne.s32.totalorder %s66, %s67
      %p81 = scmp.eq.s32.totalorder %s17, 1
      %p82 = por %p80, %p81
      %p84 = scmp.ne.s32.totalorder %s67, %s83
      %p85 = scmp.eq.s32.totalorder %s17, 0
      %p86 = por %p84, %p85
      %s87 = ssub.s32 %s11, %s18
      %p88 = scmp.eq.s32.totalorder %s87, 0
      %s90 = sadd.s32 %s89, 1
      %s91 = scalar_select %p88, %s89, %s90
      %p94 = pneg %p88
      %p95 = scmp.eq.s32.totalorder %s11, 1
      %p96 = por %p94, %p95
      %p97 = scmp.ne.s32.totalorder %s89, %s92
      %p98 = scmp.eq.s32.totalorder %s11, 0
      %p99 = por %p97, %p98
      %p100 = scmp.ne.s32.totalorder %s89, %s92
      %p101 = scmp.eq.s32.totalorder %s16, 1
      %p102 = por %p100, %p101
      %p103 = scmp.ne.s32.totalorder %s92, %s93
      %p104 = scmp.eq.s32.totalorder %s16, 0
      %p105 = por %p103, %p104
      %p106 = scmp.ne.s32.totalorder %s92, %s93
      %p107 = scmp.eq.s32.totalorder %s17, 1
      %p108 = por %p106, %p107
      %p110 = scmp.ne.s32.totalorder %s93, %s109
      %p111 = scmp.eq.s32.totalorder %s17, 0
      %p112 = por %p110, %p111
      %p113 = scmp.le.s32.totalorder 1, %s11
      %p114 = scmp.lt.s32.totalorder %s11, 3
      %p115 = pnand %p113, %p114
      %p116 = pneg %p115
      // Predicated region
      $region9: #{wavelet_forward.1} parent=5 // pred_check
        _
      $region10: #{wavelet_forward.1} parent=5 // pred_check_branch
        %118 = sbr.rel (%p115) target = $region12
      $region11: #{wavelet_forward.1} parent=5 // pred_region
        %s119 = ssub.s32 %s11, 1
        // Predicated region
        $region13: #{wavelet_forward.1} parent=11 // pred_check
          %p120 = pneg %p32
        $region14: #{wavelet_forward.1} parent=11 // pred_check_branch
          %122 = sbr.rel (%p120) target = $region16
        $region15: #{wavelet_forward.1} parent=11 // pred_region
          %s124 = ssub.s32 256, 256
          %125 = vsyncadd [#allocation4], %s124
          %s126 = sshll.u32 [#allocation3], 4
          %s127 = int_to_ptr.vmem [resolvable:$true] %s126
          %132 = dma.hbm_to_vmem [thread:$0]  %s0, 256, %s127, [#allocation4], 128, 128, 8
        $region16: #{wavelet_forward.1} parent=11 // pred_fallthru
          _
        // Predicated region
        $region17: #{wavelet_forward.1} parent=11 // pred_check
          %p133 = pneg %p53
        $region18: #{wavelet_forward.1} parent=11 // pred_check_branch
          %135 = sbr.rel (%p133) target = $region20
        $region19: #{wavelet_forward.1} parent=11 // pred_region
          %s137 = ssub.s32 1024, 1024
          %138 = vsyncadd [#allocation6], %s137
          %s139 = sshll.u32 [#allocation5], 4
          %s140 = int_to_ptr.vmem [resolvable:$true] %s139
          %145 = dma.hbm_to_vmem [thread:$0]  %s1, 1024, %s140, [#allocation6], 128, 128, 8
        $region20: #{wavelet_forward.1} parent=11 // pred_fallthru
          _
      $region12: #{wavelet_forward.1} parent=5 // pred_fallthru
        _
      %p146 = scmp.lt.s32.totalorder %s11, 2
      // Predicated region
      $region21: #{wavelet_forward.1} parent=5 // pred_check
        %p147 = pneg %p146
      $region22: #{wavelet_forward.1} parent=5 // pred_check_branch
        %149 = sbr.rel (%p147) target = $region24
      $region23: #{wavelet_forward.1} parent=5 // pred_region
        // Predicated region
        $region25: #{wavelet_forward.1} parent=23 // pred_check
          %p150 = pneg %p73
        $region26: #{wavelet_forward.1} parent=23 // pred_check_branch
          %152 = sbr.rel (%p150) target = $region28
        $region27: #{wavelet_forward.1} parent=23 // pred_region
          %s153 = sand.u32 %s11, 1
          %s154 = scalar_lea.sflag [#allocation4], %s153
          %s155 = sand.u32 %s63, 1
          %s156 = smul.addr %s155, 64
          %s157 = scalar_lea.vmem [#allocation7], %s156
          %s158 = smul.u32 8, %s11
          %s160 = ssub.s32 1024, 1024
          %161 = vsyncadd %s154, %s160
          %s162 = smul.addr %s158, 128
          %s163 = scalar_lea.hbm %s2, %s162
          %s164 = sshll.u32 %s157, 4
          %s165 = int_to_ptr.vmem [resolvable:$true] %s164
          %170 = dma.hbm_to_vmem [thread:$0]  %s163, 1024, %s165, %s154, 128, 128, 8
        $region28: #{wavelet_forward.1} parent=23 // pred_fallthru
          _
      $region24: #{wavelet_forward.1} parent=5 // pred_fallthru
        _
      %p171 = scmp.le.s32.totalorder 1, %s11
      %p172 = scmp.lt.s32.totalorder %s11, 3
      %p173 = pnand %p171, %p172
      %p174 = pneg %p173
      // Predicated region
      $region29: #{wavelet_forward.1} parent=5 // pred_check
        _
      $region30: #{wavelet_forward.1} parent=5 // pred_check_branch
        %176 = sbr.rel (%p173) target = $region32
      $region31: #{wavelet_forward.1} parent=5 // pred_region
        %s177 = ssub.s32 %s11, 1
        // Predicated region
        $region33: #{wavelet_forward.1} parent=31 // pred_check
          %p178 = pneg %p32
        $region34: #{wavelet_forward.1} parent=31 // pred_check_branch
          %180 = sbr.rel (%p178) target = $region36
        $region35: #{wavelet_forward.1} parent=31 // pred_region
          %181 = dma.done [#allocation4], 256
        $region36: #{wavelet_forward.1} parent=31 // pred_fallthru
          _
        // Predicated region
        $region37: #{wavelet_forward.1} parent=31 // pred_check
          %p182 = pneg %p53
        $region38: #{wavelet_forward.1} parent=31 // pred_check_branch
          %184 = sbr.rel (%p182) target = $region40
        $region39: #{wavelet_forward.1} parent=31 // pred_region
          %185 = dma.done [#allocation6], 1024
        $region40: #{wavelet_forward.1} parent=31 // pred_fallthru
          _
        %s186 = sand.u32 %s16, 1
        %s187 = scalar_lea.sflag [#allocation4], %s186
        %s188 = sand.u32 %s66, 1
        %s189 = smul.addr %s188, 64
        %s190 = scalar_lea.vmem [#allocation7], %s189
        // Predicated region
        $region41: #{wavelet_forward.1} parent=31 // pred_check
          %p191 = pneg %p79
        $region42: #{wavelet_forward.1} parent=31 // pred_check_branch
          %193 = sbr.rel (%p191) target = $region44
        $region43: #{wavelet_forward.1} parent=31 // pred_region
          %194 = dma.done %s187, 1024
        $region44: #{wavelet_forward.1} parent=31 // pred_fallthru
          _
        %p195 = pneg %p32
        %p196 = pneg %p29
        %p197 = pneg %p53
        %p198 = pneg %p50
        %s199 = sand.u32 %s16, 1
        %s200 = scalar_lea.sflag [#allocation4], %s199
        %s201 = sand.u32 %s66, 1
        %s202 = smul.addr %s201, 64
        %s203 = scalar_lea.vmem [#allocation7], %s202
        %p204 = pneg %p79
        %p205 = pneg %p76
        %p206 = pneg %p105
        %p207 = pneg %p102
        %s208 = smul.u32 8, %s16
        %p209 = scmp.lt.s32.totalorder %s208, 15
        %s210 = scalar_select %p209, %s208, 15
        %s211 = smul.addr %s210, 8
        %s212 = scalar_lea.vmem %s3, %s211
        %s213 = smul.u32 8, %s16
        %s214 = smul.u32 8, %s16
        %p215 = scmp.lt.s32.totalorder %s214, 15
        %s216 = scalar_select %p215, %s214, 15
        %s217 = smul.addr %s216, 8
        %s218 = scalar_lea.vmem %s3, %s217
        %s219 = smul.u32 8, %s16
        %v220 = vld [vmem:[%s190] sm:$0xff]
        %v221 = vld [vmem:[%s190 + $0x8] sm:$0xff]
        %v222 = vld [vmem:[%s190 + $0x10] sm:$0xff]
        %v223 = vld [vmem:[%s190 + $0x18] sm:$0xff]
        %v224 = vld [vmem:[%s190 + $0x20] sm:$0xff]
        %v225 = vld [vmem:[%s190 + $0x28] sm:$0xff]
        %v226 = vld [vmem:[%s190 + $0x30] sm:$0xff]
        %v227 = vld [vmem:[%s190 + $0x38] sm:$0xff]
        %v228 = vld [vmem:[#allocation3] sm:$0xff]
        %v229 = vld [vmem:[#allocation3 + $0x8] sm:$0xff]
        %vm230 = vcmask 130048
        %v232 = vsel %vm230, %v220, 0
        %v235 = vsel %vm230, %v221, 0
        %v238 = vsel %vm230, %v222, 0
        %v241 = vsel %vm230, %v223, 0
        %v244 = vsel %vm230, %v224, 0
        %v247 = vsel %vm230, %v225, 0
        %v250 = vsel %vm230, %v226, 0
        %v253 = vsel %vm230, %v227, 0
        %255 = vmatprep.subr.mxu0 0.0
        %256 = vmatpush1.msra.mxu0 0.0
        %257 = vmatprep.subr.mxu0 0.0
        %258 = vmatpush1.msra.mxu0 0.0
        %259 = vmatprep.subr.mxu0 0.0
        %260 = vmatpush1.msra.mxu0 0.0
        %261 = vmatprep.subr.mxu0 0.0
        %262 = vmatpush1.msra.mxu0 0.0
        %263 = vmatprep.subr.mxu0 0.0
        %264 = vmatpush1.msra.mxu0 0.0
        %265 = vmatprep.subr.mxu0 0.0
        %266 = vmatpush1.msra.mxu0 0.0
        %267 = vmatprep.subr.mxu0 0.0
        %268 = vmatpush1.msra.mxu0 0.0
        %269 = vmatprep.subr.mxu0 0.0
        %270 = vmatpush1.msra.mxu0 0.0
        %271 = vmatprep.subr.mxu0 0.0
        %272 = vmatpush1.msra.mxu0 0.0
        %273 = vmatprep.subr.mxu0 0.0
        %274 = vmatpush1.msra.mxu0 0.0
        %275 = vmatprep.subr.mxu0 0.0
        %276 = vmatpush1.msra.mxu0 0.0
        %277 = vmatprep.subr.mxu0 0.0
        %278 = vmatpush1.msra.mxu0 0.0
        %279 = vmatprep.subr.mxu0 0.0
        %280 = vmatpush1.msra.mxu0 0.0
        %281 = vmatprep.subr.mxu0 0.0
        %282 = vmatpush1.msra.mxu0 0.0
        %283 = vmatprep.subr.mxu0 0.0
        %284 = vmatpush1.msra.mxu0 %v229
        %285 = vmatprep.subr.mxu0 0.0
        %286 = vmatpush1.msra.mxu0 %v228
        %287 = vmatprep.subr.mxu0 0.0
        %288 = vmatpush2.msra.mxu0 0.0
        %289 = vmatprep.subr.mxu0 0.0
        %290 = vmatpush2.msra.mxu0 0.0
        %291 = vmatprep.subr.mxu0 0.0
        %292 = vmatpush2.msra.mxu0 0.0
        %293 = vmatprep.subr.mxu0 0.0
        %294 = vmatpush2.msra.mxu0 0.0
        %295 = vmatprep.subr.mxu0 0.0
        %296 = vmatpush2.msra.mxu0 0.0
        %297 = vmatprep.subr.mxu0 0.0
        %298 = vmatpush2.msra.mxu0 0.0
        %299 = vmatprep.subr.mxu0 0.0
        %300 = vmatpush2.msra.mxu0 0.0
        %301 = vmatprep.subr.mxu0 0.0
        %302 = vmatpush2.msra.mxu0 0.0
        %303 = vmatprep.subr.mxu0 0.0
        %304 = vmatpush2.msra.mxu0 0.0
        %305 = vmatprep.subr.mxu0 0.0
        %306 = vmatpush2.msra.mxu0 0.0
        %307 = vmatprep.subr.mxu0 0.0
        %308 = vmatpush2.msra.mxu0 0.0
        %309 = vmatprep.subr.mxu0 0.0
        %310 = vmatpush2.msra.mxu0 0.0
        %311 = vmatprep.subr.mxu0 0.0
        %312 = vmatpush2.msra.mxu0 0.0
        %313 = vmatprep.subr.mxu0 0.0
        %314 = vmatpush2.msra.mxu0 0.0
        %315 = vmatprep.subr.mxu0 0.0
        %316 = vmatpush2.msra.mxu0 0.0
        %317 = vmatprep.subr.mxu0 0.0
        %318 = vmatpush2.msra.mxu0 0.0
        %319 = vmatprep.mubr.f32.mxu0 0.0
        %320 = vmatmul.mubr.f32.gmra.mxu0 %v232
        %v321 = vpop.f32.mrf.mxu0
        %v322 = vadd.f32 0.0, %v321
        %v323 = vpop.f32.mrf.mxu0
        %324 = vmatprep.mubr.f32.mxu0 0.0
        %325 = vmatmul.mubr.f32.gmra.mxu0 %v235
        %v326 = vpop.f32.mrf.mxu0
        %v327 = vadd.f32 0.0, %v326
        %v328 = vpop.f32.mrf.mxu0
        %329 = vmatprep.mubr.f32.mxu0 0.0
        %330 = vmatmul.mubr.f32.gmra.mxu0 %v238
        %v331 = vpop.f32.mrf.mxu0
        %v332 = vadd.f32 0.0, %v331
        %v333 = vpop.f32.mrf.mxu0
        %334 = vmatprep.mubr.f32.mxu0 0.0
        %335 = vmatmul.mubr.f32.gmra.mxu0 %v241
        %v336 = vpop.f32.mrf.mxu0
        %v337 = vadd.f32 0.0, %v336
        %v338 = vpop.f32.mrf.mxu0
        %339 = vmatprep.mubr.f32.mxu0 0.0
        %340 = vmatmul.mubr.f32.gmra.mxu0 %v244
        %v341 = vpop.f32.mrf.mxu0
        %v342 = vadd.f32 0.0, %v341
        %v343 = vpop.f32.mrf.mxu0
        %344 = vmatprep.mubr.f32.mxu0 0.0
        %345 = vmatmul.mubr.f32.gmra.mxu0 %v247
        %v346 = vpop.f32.mrf.mxu0
        %v347 = vadd.f32 0.0, %v346
        %v348 = vpop.f32.mrf.mxu0
        %349 = vmatprep.mubr.f32.mxu0 0.0
        %350 = vmatmul.mubr.f32.gmra.mxu0 %v250
        %v351 = vpop.f32.mrf.mxu0
        %v352 = vadd.f32 0.0, %v351
        %v353 = vpop.f32.mrf.mxu0
        %354 = vmatprep.mubr.f32.mxu0 0.0
        %355 = vmatmul.mubr.f32.gmra.mxu0 %v253
        %v356 = vpop.f32.mrf.mxu0
        %v357 = vadd.f32 0.0, %v356
        %v358 = vpop.f32.mrf.mxu0
        %359 = vdwg.mxu0
        %360 = vst.msk [vmem:[#allocation2] sm:$0xff] %vm230, %v322
        %361 = vst.msk [vmem:[#allocation2 + $0x8] sm:$0xff] %vm230, %v327
        %362 = vst.msk [vmem:[#allocation2 + $0x10] sm:$0xff] %vm230, %v332
        %363 = vst.msk [vmem:[#allocation2 + $0x18] sm:$0xff] %vm230, %v337
        %364 = vst.msk [vmem:[#allocation2 + $0x20] sm:$0xff] %vm230, %v342
        %365 = vst.msk [vmem:[#allocation2 + $0x28] sm:$0xff] %vm230, %v347
        %366 = vst.msk [vmem:[#allocation2 + $0x30] sm:$0xff] %vm230, %v352
        %367 = vst.msk [vmem:[#allocation2 + $0x38] sm:$0xff] %vm230, %v357
        %v368 = vld [vmem:[#allocation5] sm:$0xff]
        %v369 = vld [vmem:[#allocation5 + $0x8] sm:$0xff]
        %v370 = vld [vmem:[#allocation5 + $0x10] sm:$0xff]
        %v371 = vld [vmem:[#allocation5 + $0x18] sm:$0xff]
        %v372 = vld [vmem:[#allocation5 + $0x20] sm:$0xff]
        %v373 = vld [vmem:[#allocation5 + $0x28] sm:$0xff]
        %v374 = vld [vmem:[#allocation5 + $0x30] sm:$0xff]
        %v375 = vld [vmem:[#allocation5 + $0x38] sm:$0xff]
        %v376 = vld [vmem:[#allocation2] sm:$0xff]
        %v377 = vld [vmem:[#allocation2 + $0x8] sm:$0xff]
        %v378 = vld [vmem:[#allocation2 + $0x10] sm:$0xff]
        %v379 = vld [vmem:[#allocation2 + $0x18] sm:$0xff]
        %v380 = vld [vmem:[#allocation2 + $0x20] sm:$0xff]
        %v381 = vld [vmem:[#allocation2 + $0x28] sm:$0xff]
        %v382 = vld [vmem:[#allocation2 + $0x30] sm:$0xff]
        %v383 = vld [vmem:[#allocation2 + $0x38] sm:$0xff]
        %vm384 = vcmask 523264
        %v386 = vsel %vm384, %v368, 0
        %v389 = vsel %vm384, %v369, 0
        %v392 = vsel %vm384, %v370, 0
        %v395 = vsel %vm384, %v371, 0
        %v398 = vsel %vm384, %v372, 0
        %v401 = vsel %vm384, %v373, 0
        %v404 = vsel %vm384, %v374, 0
        %v407 = vsel %vm384, %v375, 0
        %409 = vmatprep.subr.mxu0 0.0
        %410 = vmatpush1.msra.mxu0 0.0
        %411 = vmatprep.subr.mxu0 0.0
        %412 = vmatpush1.msra.mxu0 0.0
        %413 = vmatprep.subr.mxu0 0.0
        %414 = vmatpush1.msra.mxu0 0.0
        %415 = vmatprep.subr.mxu0 0.0
        %416 = vmatpush1.msra.mxu0 0.0
        %417 = vmatprep.subr.mxu0 0.0
        %418 = vmatpush1.msra.mxu0 0.0
        %419 = vmatprep.subr.mxu0 0.0
        %420 = vmatpush1.msra.mxu0 0.0
        %421 = vmatprep.subr.mxu0 0.0
        %422 = vmatpush1.msra.mxu0 0.0
        %423 = vmatprep.subr.mxu0 0.0
        %424 = vmatpush1.msra.mxu0 0.0
        %425 = vmatprep.subr.mxu0 0.0
        %426 = vmatpush1.msra.mxu0 %v383
        %427 = vmatprep.subr.mxu0 0.0
        %428 = vmatpush1.msra.mxu0 %v382
        %429 = vmatprep.subr.mxu0 0.0
        %430 = vmatpush1.msra.mxu0 %v381
        %431 = vmatprep.subr.mxu0 0.0
        %432 = vmatpush1.msra.mxu0 %v380
        %433 = vmatprep.subr.mxu0 0.0
        %434 = vmatpush1.msra.mxu0 %v379
        %435 = vmatprep.subr.mxu0 0.0
        %436 = vmatpush1.msra.mxu0 %v378
        %437 = vmatprep.subr.mxu0 0.0
        %438 = vmatpush1.msra.mxu0 %v377
        %439 = vmatprep.subr.mxu0 0.0
        %440 = vmatpush1.msra.mxu0 %v376
        %441 = vmatprep.subr.mxu0 0.0
        %442 = vmatpush2.msra.mxu0 0.0
        %443 = vmatprep.subr.mxu0 0.0
        %444 = vmatpush2.msra.mxu0 0.0
        %445 = vmatprep.subr.mxu0 0.0
        %446 = vmatpush2.msra.mxu0 0.0
        %447 = vmatprep.subr.mxu0 0.0
        %448 = vmatpush2.msra.mxu0 0.0
        %449 = vmatprep.subr.mxu0 0.0
        %450 = vmatpush2.msra.mxu0 0.0
        %451 = vmatprep.subr.mxu0 0.0
        %452 = vmatpush2.msra.mxu0 0.0
        %453 = vmatprep.subr.mxu0 0.0
        %454 = vmatpush2.msra.mxu0 0.0
        %455 = vmatprep.subr.mxu0 0.0
        %456 = vmatpush2.msra.mxu0 0.0
        %457 = vmatprep.subr.mxu0 0.0
        %458 = vmatpush2.msra.mxu0 0.0
        %459 = vmatprep.subr.mxu0 0.0
        %460 = vmatpush2.msra.mxu0 0.0
        %461 = vmatprep.subr.mxu0 0.0
        %462 = vmatpush2.msra.mxu0 0.0
        %463 = vmatprep.subr.mxu0 0.0
        %464 = vmatpush2.msra.mxu0 0.0
        %465 = vmatprep.subr.mxu0 0.0
        %466 = vmatpush2.msra.mxu0 0.0
        %467 = vmatprep.subr.mxu0 0.0
        %468 = vmatpush2.msra.mxu0 0.0
        %469 = vmatprep.subr.mxu0 0.0
        %470 = vmatpush2.msra.mxu0 0.0
        %471 = vmatprep.subr.mxu0 0.0
        %472 = vmatpush2.msra.mxu0 0.0
        %473 = vmatprep.mubr.f32.mxu0 0.0
        %474 = vmatmul.mubr.f32.gmra.mxu0 %v386
        %v475 = vpop.f32.mrf.mxu0
        %v476 = vadd.f32 0.0, %v475
        %v477 = vpop.f32.mrf.mxu0
        %478 = vmatprep.mubr.f32.mxu0 0.0
        %479 = vmatmul.mubr.f32.gmra.mxu0 %v389
        %v480 = vpop.f32.mrf.mxu0
        %v481 = vadd.f32 0.0, %v480
        %v482 = vpop.f32.mrf.mxu0
        %483 = vmatprep.mubr.f32.mxu0 0.0
        %484 = vmatmul.mubr.f32.gmra.mxu0 %v392
        %v485 = vpop.f32.mrf.mxu0
        %v486 = vadd.f32 0.0, %v485
        %v487 = vpop.f32.mrf.mxu0
        %488 = vmatprep.mubr.f32.mxu0 0.0
        %489 = vmatmul.mubr.f32.gmra.mxu0 %v395
        %v490 = vpop.f32.mrf.mxu0
        %v491 = vadd.f32 0.0, %v490
        %v492 = vpop.f32.mrf.mxu0
        %493 = vmatprep.mubr.f32.mxu0 0.0
        %494 = vmatmul.mubr.f32.gmra.mxu0 %v398
        %v495 = vpop.f32.mrf.mxu0
        %v496 = vadd.f32 0.0, %v495
        %v497 = vpop.f32.mrf.mxu0
        %498 = vmatprep.mubr.f32.mxu0 0.0
        %499 = vmatmul.mubr.f32.gmra.mxu0 %v401
        %v500 = vpop.f32.mrf.mxu0
        %v501 = vadd.f32 0.0, %v500
        %v502 = vpop.f32.mrf.mxu0
        %503 = vmatprep.mubr.f32.mxu0 0.0
        %504 = vmatmul.mubr.f32.gmra.mxu0 %v404
        %v505 = vpop.f32.mrf.mxu0
        %v506 = vadd.f32 0.0, %v505
        %v507 = vpop.f32.mrf.mxu0
        %508 = vmatprep.mubr.f32.mxu0 0.0
        %509 = vmatmul.mubr.f32.gmra.mxu0 %v407
        %v510 = vpop.f32.mrf.mxu0
        %v511 = vadd.f32 0.0, %v510
        %v512 = vpop.f32.mrf.mxu0
        %513 = vdwg.mxu0
        %514 = vst.msk [vmem:[%s218] sm:$0xff] %vm230, %v476
        %515 = vst.msk [vmem:[%s218 + $0x8] sm:$0xff] %vm230, %v481
        %516 = vst.msk [vmem:[%s218 + $0x10] sm:$0xff] %vm230, %v486
        %517 = vst.msk [vmem:[%s218 + $0x18] sm:$0xff] %vm230, %v491
        %518 = vst.msk [vmem:[%s218 + $0x20] sm:$0xff] %vm230, %v496
        %519 = vst.msk [vmem:[%s218 + $0x28] sm:$0xff] %vm230, %v501
        %520 = vst.msk [vmem:[%s218 + $0x30] sm:$0xff] %vm230, %v506
        %521 = vst.msk [vmem:[%s218 + $0x38] sm:$0xff] %vm230, %v511
        %s522 = smul.u32 8, %s16
        %p523 = scmp.lt.s32.totalorder %s522, 15
        %s524 = scalar_select %p523, %s522, 15
        %s525 = smul.addr %s524, 8
        %s526 = scalar_lea.vmem %s3, %s525
        // Predicated region
        $region45: #{wavelet_forward.1} parent=31 // pred_check
          %p527 = pneg %p102
        $region46: #{wavelet_forward.1} parent=31 // pred_check_branch
          %529 = sbr.rel (%p527) target = $region48
        $region47: #{wavelet_forward.1} parent=31 // pred_region
          %s530 = smul.u32 8, %s16
        $region48: #{wavelet_forward.1} parent=31 // pred_fallthru
          _
      $region32: #{wavelet_forward.1} parent=5 // pred_fallthru
        _
      %p531 = scmp.le.s32.totalorder 2, %s11
      // Predicated region
      $region49: #{wavelet_forward.1} parent=5 // pred_check
        %p532 = pneg %p531
      $region50: #{wavelet_forward.1} parent=5 // pred_check_branch
        %534 = sbr.rel (%p532) target = $region52
      $region51: #{wavelet_forward.1} parent=5 // pred_region
        %s535 = ssub.s32 %s11, 2
        // Predicated region
        $region53: #{wavelet_forward.1} parent=51 // pred_check
          %p536 = pneg %p108
        $region54: #{wavelet_forward.1} parent=51 // pred_check_branch
          %538 = sbr.rel (%p536) target = $region56
        $region55: #{wavelet_forward.1} parent=51 // pred_region
          %s539 = smul.u32 8, %s17
          %p540 = scmp.lt.s32.totalorder %s539, 15
          %s541 = scalar_select %p540, %s539, 15
          %s542 = smul.addr %s541, 8
          %s543 = scalar_lea.vmem %s3, %s542
        $region56: #{wavelet_forward.1} parent=51 // pred_fallthru
          _
      $region52: #{wavelet_forward.1} parent=5 // pred_fallthru
        _
    $region6: #{wavelet_forward.1} parent=1 // loop_footer
      %s15 = sadd.s32 1, %s11
    $region7: #{wavelet_forward.1} parent=1 // loop_footer_branch
      %10 = sbr.rel target = $region3
    $region8: #{wavelet_forward.1} parent=1 // loop_exit
      _
    %544 = vsyncpa [#allocation4], 1
    %s545 = scalar_lea.sflag [#allocation4], 1
    %546 = vsyncpa %s545, 1
    %547 = vsyncpa [#allocation6], 1

</llo_original>
